<compile_context>
chip_gen: v6e
topology: v6e:2x2x1
jax: 0.10.0
libtpu: 0.0.40
codegen_flags: <defaults>
</compile_context>

<pallas_src>
import jax
import jax.numpy as jnp
from jax import lax
from jax.experimental import pallas as pl
from jax.experimental.pallas import tpu as pltpu


def _round_up(a: int, m: int) -> int:
    return ((a + m - 1) // m) * m


# ---------------------------------------------------------------------------
# Fast path: whole table resident in VMEM, gather rows with dynamic slices.
# ---------------------------------------------------------------------------
def _vmem_gather_kernel(ids_ref, table_ref, out_ref):
    # ids_ref:   (N_pad,) int32 in SMEM (scalar prefetch)
    # table_ref: (V, D)   in VMEM (grid-invariant block)
    # out_ref:   (TS, D)  in VMEM (this step's output rows)
    step = pl.program_id(0)
    ts = out_ref.shape[0]
    base = step * ts

    def body(t, carry):
        row = ids_ref[base + t]
        out_ref[pl.ds(t, 1), :] = table_ref[pl.ds(row, 1), :]
        return carry

    lax.fori_loop(0, ts, body, 0)


# ---------------------------------------------------------------------------
# Large-table path: table stays in HBM, per-row DMA straight into the out tile.
# ---------------------------------------------------------------------------
def _hbm_gather_kernel(ids_ref, table_ref, out_ref, sem):
    # ids_ref:   (N_pad,) int32 in SMEM (scalar prefetch)
    # table_ref: (V, D)   in HBM (pl.ANY)
    # out_ref:   (TS, D)  in VMEM
    # sem:       (8,) DMA semaphores, shared round-robin by the row copies
    step = pl.program_id(0)
    ts = out_ref.shape[0]
    base = step * ts

    # Front-load all SMEM scalar reads and DMA starts, then wait on all copies
    # (keeps every row copy in flight simultaneously; .wait() would otherwise
    # break sst->sld forwarding for later id reads).
    copies = []
    for t in range(ts):  # static unroll
        row = ids_ref[base + t]
        cp = pltpu.make_async_copy(
            table_ref.at[pl.ds(row, 1), :],   # one (1, D) row in HBM
            out_ref.at[pl.ds(t, 1), :],       # DMA straight into output tile
            sem.at[t % 8],
        )
        cp.start()
        copies.append(cp)
    for cp in copies:
        cp.wait()


def token_embedding(x, table, *, tokens_per_step=None, force_hbm_gather=False):
    """x: (B, S) int token ids; table: (V, D). Returns (B, S, D)."""
    B, S = x.shape
    V, D = table.shape
    N = B * S
    itemsize = table.dtype.itemsize

    # Sublane packing: 8 rows for f32, 16 for bf16, 32 for int8.
    sub = max(8, 32 // itemsize)

    # TS from VMEM budget: double-buffered (TS, D) out tile <= ~8 MiB, cap 512.
    budget = 8 * 1024 * 1024
    if tokens_per_step is not None:
        ts = tokens_per_step
    else:
        ts = min(512, max(sub, budget // max(1, 2 * D * itemsize)))
    ts = min(ts, _round_up(max(N, 1), sub))           # never bigger than the work
    if N > sub:                                       # >=2 grid steps (v7x megacore)
        ts = min(ts, _round_up((N + 1) // 2, sub))
    ts = max(sub, (ts // sub) * sub)

    n_pad = _round_up(max(N, 1), ts)

    ids = x.reshape(N).astype(jnp.int32)
    if n_pad != N:
        ids = jnp.pad(ids, (0, n_pad - N))            # pad with row 0; sliced off

    grid = (n_pad // ts,)
    small_table = (V * D * itemsize) <= 4 * 1024 * 1024

    compiler_params = pltpu.CompilerParams(
        dimension_semantics=("parallel",),
        vmem_limit_bytes=32 * 1024 * 1024,
    )

    if small_table and not force_hbm_gather:
        out = pl.pallas_call(
            _vmem_gather_kernel,
            out_shape=jax.ShapeDtypeStruct((n_pad, D), table.dtype),
            grid_spec=pltpu.PrefetchScalarGridSpec(
                num_scalar_prefetch=1,                       # ids -> SMEM
                grid=grid,
                in_specs=[
                    # Whole table, grid-invariant -> loaded into VMEM once.
                    pl.BlockSpec((V, D), lambda i, ids_smem: (0, 0)),
                ],
                out_specs=pl.BlockSpec((ts, D), lambda i, ids_smem: (i, 0)),
            ),
            compiler_params=compiler_params,
        )(ids, table)
    else:
        out = pl.pallas_call(
            _hbm_gather_kernel,
            out_shape=jax.ShapeDtypeStruct((n_pad, D), table.dtype),
            grid_spec=pltpu.PrefetchScalarGridSpec(
                num_scalar_prefetch=1,                       # ids -> SMEM
                grid=grid,
                in_specs=[
                    pl.BlockSpec(memory_space=pl.ANY),       # table stays in HBM
                ],
                out_specs=pl.BlockSpec((ts, D), lambda i, ids_smem: (i, 0)),
                scratch_shapes=[pltpu.SemaphoreType.DMA((8,))],
            ),
            compiler_params=compiler_params,
        )(ids, table)

    if n_pad != N:
        out = out[:N]
    return out.reshape(B, S, D)


if __name__ == "__main__":
    # Small, deterministic setup consistent with TokenEmbedding(vocab_size, d_model)
    vocab_size = 64
    d_model = 32
    batch, seq = 2, 8

    key = jax.random.PRNGKey(0)
    k_tab, k_ids = jax.random.split(key)

    # nn.Embedding default init: weight ~ N(0, 1)
    table = jax.random.normal(k_tab, (vocab_size, d_model), dtype=jnp.float32)
    x = jax.random.randint(k_ids, (batch, seq), 0, vocab_size, dtype=jnp.int32)

    # Reference: plain gather (exactly nn.Embedding forward semantics)
    ref = jnp.take(table, x, axis=0)

    # Small-table fast path (VMEM-resident table).
    out_fast = jax.block_until_ready(token_embedding(x, table))
    assert out_fast.shape == (batch, seq, d_model)
    assert out_fast.dtype == jnp.float32
    assert jnp.allclose(out_fast, ref, atol=1e-6, rtol=1e-6)

    # Large-table path (HBM table + per-row DMA gather), forced for validation.
    out_hbm = jax.block_until_ready(
        token_embedding(x, table, force_hbm_gather=True))
    assert out_hbm.shape == (batch, seq, d_model)
    assert jnp.allclose(out_hbm, ref, atol=1e-6, rtol=1e-6)

    print("KERNEL_OK")
</pallas_src>

<mosaic_0001>
module attributes {stable_mosaic.version = 11 : i64} {
  func.func @_vmem_gather_kernel(%arg0: i32, %arg1: memref<16xi32, #tpu.memory_space<smem>>, %arg2: memref<64x32xf32, #tpu.memory_space<vmem>>, %arg3: memref<8x32xf32, #tpu.memory_space<vmem>>) attributes {dimension_semantics = [#tpu.dimension_semantics<parallel>], iteration_bounds = array<i64: 2>, scalar_prefetch = 1 : i64, scratch_operands = 0 : i64, tpu.core_type = #tpu.core_type<tc>, window_params = [{pipeline_mode = #tpu.pipeline_mode<synchronous>, transform_indices = @transform_0, window_bounds = array<i64: 64, 32>}, {transform_indices = @transform_1, window_bounds = array<i64: 8, 32>}]} {
    %c8_i32 = arith.constant 8 : i32
    %0 = arith.muli %arg0, %c8_i32 : i32
    %c0_i32 = arith.constant 0 : i32
    %c8_i32_0 = arith.constant 8 : i32
    %1 = arith.addi %c0_i32, %c8_i32_0 : i32
    %c1_i32 = arith.constant 1 : i32
    scf.for %arg4 = %c0_i32 to %1 step %c1_i32  : i32 {
      %2 = arith.addi %0, %arg4 : i32
      %3 = arith.index_cast %2 : i32 to index
      %4 = memref.load %arg1[%3] : memref<16xi32, #tpu.memory_space<smem>>
      %5 = arith.index_cast %4 : i32 to index
      %c0 = arith.constant 0 : index
      %6 = vector.load %arg2[%5, %c0] : memref<64x32xf32, #tpu.memory_space<vmem>>, vector<1x32xf32>
      %7 = arith.index_cast %arg4 : i32 to index
      %c0_2 = arith.constant 0 : index
      %8 = vector.load %arg3[%7, %c0_2] : memref<8x32xf32, #tpu.memory_space<vmem>>, vector<1x32xf32>
      tpu.vector_store %arg3[%7, %c0_2], %6 {strides = array<i32>} : memref<8x32xf32, #tpu.memory_space<vmem>>, vector<1x32xf32>,
    }
    %c8_i32_1 = arith.constant 8 : i32
    return
  }
  func.func @transform_0(%arg0: i32, %arg1: memref<16xi32, #tpu.memory_space<smem>>) -> (i32, i32) {
    %c0_i32 = arith.constant 0 : i32
    %c0_i32_0 = arith.constant 0 : i32
    %c0_i32_1 = arith.constant 0 : i32
    return %c0_i32, %c0_i32_0 : i32, i32
  }
  func.func @transform_1(%arg0: i32, %arg1: memref<16xi32, #tpu.memory_space<smem>>) -> (i32, i32) {
    %c0_i32 = arith.constant 0 : i32
    %c0_i32_0 = arith.constant 0 : i32
    return %arg0, %c0_i32 : i32, i32
  }
}

</mosaic_0001>

<llo_original>
// kernel: tpu_custom_call.1
$region0: #{tpu_custom_call.1}
  #allocation0 [shape = 'u32[]', space=smem, size = 0x4, offset = 0x4, fixed_abs, tag = 'smem constant byte address 0x4 - core index']
  #allocation1 [shape = 'u32[144,128]{1,0:T(1,128)}', space=vmem, size = 0x12000, scoped, tag = 'internal scratch']
  #allocation2 [shape = 's32[1]{0}', space=sflag, size = 0x4, scoped, tag = 'scoped memory for tpu_custom_call.1']
  #allocation3 [shape = 'u8[512]{0}', space=smem, size = 0x200, scoped, tag = 'prefetched SMEM operand 0']
  %s0 = inlined_call_operand.vmem [shape: s32[16], index: 0, kind: input, shape index: {}]
  %s1 = inlined_call_operand.vmem [shape: f32[64,32], index: 1, kind: input, shape index: {}]
  %s2 = inlined_call_operand.hbm [shape: f32[16,32], index: 2, kind: output, shape index: {}]
  %s3 = sld [smem:[#allocation0]]
  $region44: #{tpu_custom_call.1} parent=0
    _
  %s5 = ssub.s32 1, %s3
  %s6 = scalar_select 0, %s5, %s3
  %s7 = sshll.u32 %s0, 4
  %s8 = int_to_ptr.vmem [resolvable:$true] %s7
  %10 = dma.vmem_to_smem %s8, 16, [#allocation3], [#allocation2]
  %11 = dma.done [#allocation2], 16
  %12 = sfence
  $region1: #{tpu_custom_call.1} parent=0
    #allocation4 [shape = 'u8[8192]{0}', space=vmem, size = 0x2000, scoped, tag = 'output window, operand 0']
    #allocation5 [shape = 's32[2]{0}', space=sflag, size = 0x8, scoped, tag = 'scoped memory for tpu_custom_call.1']
    %13 = vsyncpa [#allocation5], 0
    %s14 = scalar_lea.sflag [#allocation5], 1
    %15 = vsyncpa %s14, 0
    loop: start=0, step=1, limit=4
    $region2: #{tpu_custom_call.1} parent=1 // loop_pre_header
      _
    $region3: #{tpu_custom_call.1} parent=1 // loop_header
      %s17 = sphi 0, %s21
      %p18 = scmp.ge.s32.totalorder %s17, 4
      %s25 = sphi 0, %s25
      %s27 = sphi 0, %s25
      %s28 = sphi 0, %s27
      %s42 = sphi 0, %s28
      %s48 = sphi 0, %s50
      %s51 = sphi 0, %s48
      %s52 = sphi 0, %s51
      %s68 = sphi 0, %s52
    $region4: #{tpu_custom_call.1} parent=1 // loop_header_branch
      %20 = sbr.rel (%p18) target = $region8
    $region5: #{tpu_custom_call.1} parent=1 // loop_body
      %s22 = ssub.s32 %s17, 1
      %s23 = ssub.s32 %s17, 2
      %s24 = sadd.s32 %s17, 1
      %s26 = sadd.s32 %s25, 1
      %p29 = scmp.eq.s32.totalorder %s17, 1
      %p30 = scmp.ne.s32.totalorder %s25, %s27
      %p31 = scmp.eq.s32.totalorder %s17, 0
      %p32 = por %p30, %p31
      %p33 = scmp.ne.s32.totalorder %s25, %s27
      %p34 = scmp.eq.s32.totalorder %s22, 1
      %p35 = por %p33, %p34
      %p36 = scmp.ne.s32.totalorder %s27, %s28
      %p37 = scmp.eq.s32.totalorder %s22, 0
      %p38 = por %p36, %p37
      %p39 = scmp.ne.s32.totalorder %s27, %s28
      %p40 = scmp.eq.s32.totalorder %s23, 1
      %p41 = por %p39, %p40
      %p43 = scmp.ne.s32.totalorder %s28, %s42
      %p44 = scmp.eq.s32.totalorder %s23, 0
      %p45 = por %p43, %p44
      %s46 = ssub.s32 %s17, %s24
      %p47 = scmp.eq.s32.totalorder %s46, 0
      %s49 = sadd.s32 %s48, 1
      %s50 = scalar_select %p47, %s48, %s49
      %p53 = pneg %p47
      %p54 = scmp.eq.s32.totalorder %s17, 1
      %p55 = por %p53, %p54
      %p56 = scmp.ne.s32.totalorder %s48, %s51
      %p57 = scmp.eq.s32.totalorder %s17, 0
      %p58 = por %p56, %p57
      %p59 = scmp.ne.s32.totalorder %s48, %s51
      %p60 = scmp.eq.s32.totalorder %s22, 1
      %p61 = por %p59, %p60
      %p62 = scmp.ne.s32.totalorder %s51, %s52
      %p63 = scmp.eq.s32.totalorder %s22, 0
      %p64 = por %p62, %p63
      %p65 = scmp.ne.s32.totalorder %s51, %s52
      %p66 = scmp.eq.s32.totalorder %s23, 1
      %p67 = por %p65, %p66
      %p69 = scmp.ne.s32.totalorder %s52, %s68
      %p70 = scmp.eq.s32.totalorder %s23, 0
      %p71 = por %p69, %p70
      %p72 = scmp.le.s32.totalorder 1, %s17
      %p73 = scmp.lt.s32.totalorder %s17, 3
      %p74 = pnand %p72, %p73
      %p75 = pneg %p74
      // Predicated region
      $region9: #{tpu_custom_call.1} parent=5 // pred_check
        _
      $region10: #{tpu_custom_call.1} parent=5 // pred_check_branch
        %77 = sbr.rel (%p74) target = $region12
      $region11: #{tpu_custom_call.1} parent=5 // pred_region
        %s78 = ssub.s32 %s17, 1
        // Predicated region
        $region13: #{tpu_custom_call.1} parent=11 // pred_check
          %p79 = pneg %p38
        $region14: #{tpu_custom_call.1} parent=11 // pred_check_branch
          %81 = sbr.rel (%p79) target = $region16
        $region15: #{tpu_custom_call.1} parent=11 // pred_region
          _
        $region16: #{tpu_custom_call.1} parent=11 // pred_fallthru
          _
      $region12: #{tpu_custom_call.1} parent=5 // pred_fallthru
        _
      %p82 = scmp.lt.s32.totalorder %s17, 2
      // Predicated region
      $region17: #{tpu_custom_call.1} parent=5 // pred_check
        %p83 = pneg %p82
      $region18: #{tpu_custom_call.1} parent=5 // pred_check_branch
        %85 = sbr.rel (%p83) target = $region20
      $region19: #{tpu_custom_call.1} parent=5 // pred_region
        _
      $region20: #{tpu_custom_call.1} parent=5 // pred_fallthru
        _
      %p86 = scmp.le.s32.totalorder 1, %s17
      %p87 = scmp.lt.s32.totalorder %s17, 3
      %p88 = pnand %p86, %p87
      %p89 = pneg %p88
      // Predicated region
      $region21: #{tpu_custom_call.1} parent=5 // pred_check
        _
      $region22: #{tpu_custom_call.1} parent=5 // pred_check_branch
        %91 = sbr.rel (%p88) target = $region24
      $region23: #{tpu_custom_call.1} parent=5 // pred_region
        %s92 = ssub.s32 %s17, 1
        %p93 = pneg %p38
        %p94 = pneg %p35
        %p95 = pneg %p64
        %p96 = pneg %p61
        %s97 = sand.u32 %s51, 1
        %s98 = scalar_lea.sflag [#allocation5], %s97
        %s99 = sand.u32 %s51, 1
        %s100 = smul.addr %s99, 8
        %s101 = scalar_lea.vmem [#allocation4], %s100
        %s102 = smul.u32 %s22, 8
        loop: start=0, step=1, limit=8
        $region25: #{tpu_custom_call.1} parent=23 // loop_pre_header
          _
        $region26: #{tpu_custom_call.1} parent=23 // loop_header
          %s104 = sphi 0, %s108
          %p105 = scmp.ge.s32.totalorder %s104, 8
        $region27: #{tpu_custom_call.1} parent=23 // loop_header_branch
          %107 = sbr.rel (%p105) target = $region31
        $region28: #{tpu_custom_call.1} parent=23 // loop_body
          %s109 = sadd.s32 %s102, %s104
          %s110 = sld [smem:[#allocation3 + %s109]]
          %s111 = scalar_lea.vmem %s1, %s110
          %v112 = vld [vmem:[%s111] sm:$0x1]
          %s113 = scalar_lea.vmem %s101, %s104 [#allocation4]
          %vm114 = vcmask 253952
          %115 = vst.msk [vmem:[%s113] sm:$0x1] %vm114, %v112
        $region29: #{tpu_custom_call.1} parent=23 // loop_footer
          %s108 = sadd.s32 1, %s104
        $region30: #{tpu_custom_call.1} parent=23 // loop_footer_branch
          %103 = sbr.rel target = $region26
        $region31: #{tpu_custom_call.1} parent=23 // loop_exit
          _
        %s116 = sand.u32 %s51, 1
        %s117 = scalar_lea.sflag [#allocation5], %s116
        %s118 = sand.u32 %s51, 1
        %s119 = smul.addr %s118, 8
        %s120 = scalar_lea.vmem [#allocation4], %s119
        // Predicated region
        $region32: #{tpu_custom_call.1} parent=23 // pred_check
          %p121 = pneg %p61
        $region33: #{tpu_custom_call.1} parent=23 // pred_check_branch
          %123 = sbr.rel (%p121) target = $region35
        $region34: #{tpu_custom_call.1} parent=23 // pred_region
          %s125 = ssub.s32 128, 128
          %126 = vsyncadd %s117, %s125
          %s127 = smul.addr %s22, 128
          %s128 = scalar_lea.hbm %s2, %s127
          %s130 = sshll.u32 %s120, 4
          %s131 = int_to_ptr.vmem [resolvable:$true] %s130
          %133 = dma.vmem_to_hbm [thread:$0]  %s131, 128, %s128, %s117
        $region35: #{tpu_custom_call.1} parent=23 // pred_fallthru
          _
      $region24: #{tpu_custom_call.1} parent=5 // pred_fallthru
        _
      %p134 = scmp.le.s32.totalorder 2, %s17
      // Predicated region
      $region36: #{tpu_custom_call.1} parent=5 // pred_check
        %p135 = pneg %p134
      $region37: #{tpu_custom_call.1} parent=5 // pred_check_branch
        %137 = sbr.rel (%p135) target = $region39
      $region38: #{tpu_custom_call.1} parent=5 // pred_region
        %s138 = ssub.s32 %s17, 2
        // Predicated region
        $region40: #{tpu_custom_call.1} parent=38 // pred_check
          %p139 = pneg %p67
        $region41: #{tpu_custom_call.1} parent=38 // pred_check_branch
          %141 = sbr.rel (%p139) target = $region43
        $region42: #{tpu_custom_call.1} parent=38 // pred_region
          %s142 = sand.u32 %s52, 1
          %s143 = scalar_lea.sflag [#allocation5], %s142
          %s144 = sand.u32 %s52, 1
          %s145 = smul.addr %s144, 8
          %s146 = scalar_lea.vmem [#allocation4], %s145
          %147 = dma.done %s143, 128
        $region43: #{tpu_custom_call.1} parent=38 // pred_fallthru
          _
      $region39: #{tpu_custom_call.1} parent=5 // pred_fallthru
        _
    $region6: #{tpu_custom_call.1} parent=1 // loop_footer
      %s21 = sadd.s32 1, %s17
    $region7: #{tpu_custom_call.1} parent=1 // loop_footer_branch
      %16 = sbr.rel target = $region3
    $region8: #{tpu_custom_call.1} parent=1 // loop_exit
      _
    %148 = vsyncpa [#allocation5], 1
    %s149 = scalar_lea.sflag [#allocation5], 1
    %150 = vsyncpa %s149, 1

</llo_original>
